<compile_context>
chip_gen: v6e
topology: v6e:2x2x1
jax: 0.10.0
libtpu: 0.0.40
codegen_flags: <defaults>
</compile_context>

<pallas_src>
import functools

import jax
import jax.numpy as jnp
import numpy as np
from jax import lax
from jax.experimental import pallas as pl
from jax.experimental.pallas import tpu as pltpu


# lax.dot_general dimension_numbers for  A[m,k] x B[n,k] -> [m,n]
# (contraction on the last axis of both operands).
_CONTRACT_LAST = (((1,), (1,)), ((), ()))


def _qfunction_kernel(n_layers, obs_ref, act_ref, *refs):
    """Feature-major MLP: activations are [features, tb] with batch in lanes.

    refs = (W0_obs^T, W0_act^T, b0,
            W1^T, b1, ..., W_{n_layers-1}^T, b_{n_layers-1},
            w_out(col), b_out, out_ref)
    """
    param_refs = refs[:-1]
    out_ref = refs[-1]

    # --- layer 0: split-W0, contract on the feature axis --------------------
    # obs_ref: [tb, obs_dim], act_ref: [tb, act_dim]  (batch-major, f32)
    # W0_obs^T: [hidden, obs_dim], W0_act^T: [hidden, act_dim], b0: [hidden, 1]
    w0o = param_refs[0][...]
    w0a = param_refs[1][...]
    b0 = param_refs[2][...]
    z = (
        lax.dot_general(w0o, obs_ref[...], _CONTRACT_LAST,
                        preferred_element_type=jnp.float32)
        + lax.dot_general(w0a, act_ref[...], _CONTRACT_LAST,
                          preferred_element_type=jnp.float32)
        + b0
    )
    h = jnp.maximum(z, 0.0)                              # [hidden, tb] f32

    # --- hidden layers 1..n_layers-1: Linear + ReLU, feature-major ----------
    idx = 3
    for _ in range(n_layers - 1):
        wt = param_refs[idx][...]                        # [hidden, hidden]
        b = param_refs[idx + 1][...]                     # [hidden, 1]
        h = jnp.maximum(
            jnp.dot(wt, h, preferred_element_type=jnp.float32) + b, 0.0)
        idx += 2

    # --- output layer (hidden -> 1): VPU multiply + sublane reduce ----------
    w_out = param_refs[idx][...]                         # [hidden, 1]
    b_out = param_refs[idx + 1][...]                     # [1, 1]
    q = jnp.sum(w_out * h, axis=0, keepdims=True) + b_out   # [1, tb] lane-dense
    out_ref[...] = q.astype(out_ref.dtype)


def _tensorcores_per_device():
    """TensorCores one pallas_call's 'parallel' grid axes can be sharded over.

    v7x has 2 TCs per device; v5e/v6e have 1 (so a forced grid split there is
    pure per-step overhead).
    """
    try:
        kind = jax.devices()[0].device_kind.lower()
    except Exception:
        return 1
    return 2 if ("v7" in kind or "7x" in kind) else 1


def _pick_batch_tile(B, min_steps, max_tb):
    """Pick the batch tile:
       * a single full-batch block when one step suffices and B <= max_tb,
       * else the largest 128-multiple divisor of B giving >= min_steps steps,
       * else (ragged B) fall back to one full-batch block."""
    if min_steps <= 1 and B <= max_tb:
        return B
    best = None
    t = 128
    while t <= min(max_tb, B):
        if B % t == 0 and B // t >= min_steps:
            best = t
        t += 128
    return best if best is not None else B


def qfunction_forward(obs, action, params, *, n_layers, max_tb=2048):
    """Pallas QFunction forward.

    obs:    [B, obs_dim]    float32
    action: [B, action_dim] float32
    params: flat list [W0, b0, W1, b1, ..., W_out, b_out]
            W: [in, out], b: [1, out]  (as produced by init_params)
    Returns q: [B, 1] float32.
    """
    assert n_layers >= 1
    B, obs_dim = obs.shape
    Ba, action_dim = action.shape
    assert B == Ba, "obs/action batch mismatch"

    # Generation-aware batch tiling: one big step unless there are multiple
    # TensorCores to feed (v7x), in which case keep >= 2 parallel steps.
    tb = _pick_batch_tile(B, min_steps=_tensorcores_per_device(), max_tb=max_tb)
    grid = (B // tb,)
    assert B % tb == 0

    # --- tiny weight-layout prep (feature-count sized, does NOT scale with B)
    # Layer 0 split into obs/action halves, transposed to [out, in]; biases
    # become columns [out, 1]; everything stays f32.
    w0, b0 = params[0], params[1]
    kern_params = [
        jnp.asarray(w0[:obs_dim].T, jnp.float32),        # [hidden, obs_dim]
        jnp.asarray(w0[obs_dim:].T, jnp.float32),        # [hidden, action_dim]
        jnp.asarray(b0.reshape(-1, 1), jnp.float32),     # [hidden, 1]
    ]
    for li in range(1, n_layers):
        kern_params.append(jnp.asarray(params[2 * li].T, jnp.float32))               # [hidden, hidden]
        kern_params.append(jnp.asarray(params[2 * li + 1].reshape(-1, 1), jnp.float32))
    kern_params.append(jnp.asarray(params[2 * n_layers], jnp.float32))                # [hidden, 1]
    kern_params.append(jnp.asarray(params[2 * n_layers + 1].reshape(1, 1), jnp.float32))

    # --- specs ---------------------------------------------------------------
    in_specs = [
        pl.BlockSpec((tb, obs_dim), lambda i: (i, 0)),
        pl.BlockSpec((tb, action_dim), lambda i: (i, 0)),
    ]
    for p in kern_params:
        # nd default arg avoids the late-binding closure bug.
        in_specs.append(pl.BlockSpec(p.shape, lambda i, nd=p.ndim: (0,) * nd))

    out_specs = pl.BlockSpec((1, tb), lambda i: (0, i))   # lane-dense output row

    kernel = functools.partial(_qfunction_kernel, n_layers)

    q_row = pl.pallas_call(
        kernel,
        out_shape=jax.ShapeDtypeStruct((1, B), jnp.float32),
        grid_spec=pltpu.PrefetchScalarGridSpec(
            num_scalar_prefetch=0,
            grid=grid,
            in_specs=in_specs,
            out_specs=out_specs,
        ),
        compiler_params=pltpu.CompilerParams(
            dimension_semantics=("parallel",),
        ),
    )(obs, action, *kern_params)

    return q_row.reshape(B, 1)


def init_params(key, obs_dim, action_dim, n_layers, hidden_dim):
    """Deterministic synthetic init mirroring build_mlp's layer shapes."""
    dims = [obs_dim + action_dim] + [hidden_dim] * n_layers + [1]
    params = []
    for li in range(len(dims) - 1):
        key, wk = jax.random.split(key)
        fan_in, fan_out = dims[li], dims[li + 1]
        w = jax.random.normal(wk, (fan_in, fan_out), jnp.float32) / np.sqrt(fan_in)
        b = jnp.zeros((1, fan_out), jnp.float32)
        params += [w, b]
    return params


def qfunction_reference(obs, action, params, n_layers):
    """Plain-JAX (f32) reference matching the PyTorch module."""
    x = jnp.concatenate([obs, action], axis=1)
    for layer in range(n_layers):
        x = jnp.maximum(x @ params[2 * layer] + params[2 * layer + 1], 0.0)
    return x @ params[2 * n_layers] + params[2 * n_layers + 1]


if __name__ == "__main__":
    # Small dims consistent with the module.  On v5e/v6e this runs as a single
    # full-batch grid step; on v7x it splits into two 256-wide parallel tiles.
    B, OBS_DIM, ACT_DIM = 512, 24, 8
    N_LAYERS, HIDDEN = 2, 32

    key = jax.random.PRNGKey(0)
    k_obs, k_act, k_par = jax.random.split(key, 3)

    obs = jax.random.normal(k_obs, (B, OBS_DIM), jnp.float32)
    action = jax.random.normal(k_act, (B, ACT_DIM), jnp.float32)
    params = init_params(k_par, OBS_DIM, ACT_DIM, N_LAYERS, HIDDEN)

    q = qfunction_forward(obs, action, params, n_layers=N_LAYERS)
    q = jax.block_until_ready(q)

    q_ref = qfunction_reference(obs, action, params, N_LAYERS)
    assert q.shape == (B, 1)
    # f32 end-to-end now; tolerance only covers MXU vs XLA accumulation-order
    # / default-matmul-precision differences.
    np.testing.assert_allclose(np.asarray(q), np.asarray(q_ref), rtol=2e-2, atol=2e-2)

    print("KERNEL_OK")
</pallas_src>

<mosaic_0001>
module attributes {stable_mosaic.version = 11 : i64} {
  func.func @_qfunction_kernel(%arg0: i32, %arg1: memref<512x24xf32, #tpu.memory_space<vmem>>, %arg2: memref<512x8xf32, #tpu.memory_space<vmem>>, %arg3: memref<32x24xf32, #tpu.memory_space<vmem>>, %arg4: memref<32x8xf32, #tpu.memory_space<vmem>>, %arg5: memref<32x1xf32, #tpu.memory_space<vmem>>, %arg6: memref<32x32xf32, #tpu.memory_space<vmem>>, %arg7: memref<32x1xf32, #tpu.memory_space<vmem>>, %arg8: memref<32x1xf32, #tpu.memory_space<vmem>>, %arg9: memref<1x1xf32, #tpu.memory_space<vmem>>, %arg10: memref<1x512xf32, #tpu.memory_space<vmem>>) attributes {dimension_semantics = [#tpu.dimension_semantics<parallel>], iteration_bounds = array<i64: 1>, scalar_prefetch = 0 : i64, scratch_operands = 0 : i64, tpu.core_type = #tpu.core_type<tc>, window_params = [{transform_indices = @transform_0, window_bounds = array<i64: 512, 24>}, {transform_indices = @transform_1, window_bounds = array<i64: 512, 8>}, {pipeline_mode = #tpu.pipeline_mode<synchronous>, transform_indices = @transform_2, window_bounds = array<i64: 32, 24>}, {pipeline_mode = #tpu.pipeline_mode<synchronous>, transform_indices = @transform_3, window_bounds = array<i64: 32, 8>}, {pipeline_mode = #tpu.pipeline_mode<synchronous>, transform_indices = @transform_4, window_bounds = array<i64: 32, 1>}, {pipeline_mode = #tpu.pipeline_mode<synchronous>, transform_indices = @transform_5, window_bounds = array<i64: 32, 32>}, {pipeline_mode = #tpu.pipeline_mode<synchronous>, transform_indices = @transform_6, window_bounds = array<i64: 32, 1>}, {pipeline_mode = #tpu.pipeline_mode<synchronous>, transform_indices = @transform_7, window_bounds = array<i64: 32, 1>}, {pipeline_mode = #tpu.pipeline_mode<synchronous>, transform_indices = @transform_8, window_bounds = array<i64: 1, 1>}, {transform_indices = @transform_9, window_bounds = array<i64: 1, 512>}]} {
    %c0 = arith.constant 0 : index
    %c0_0 = arith.constant 0 : index
    %0 = vector.load %arg3[%c0, %c0_0] : memref<32x24xf32, #tpu.memory_space<vmem>>, vector<32x24xf32>
    %c0_1 = arith.constant 0 : index
    %c0_2 = arith.constant 0 : index
    %1 = vector.load %arg4[%c0_1, %c0_2] : memref<32x8xf32, #tpu.memory_space<vmem>>, vector<32x8xf32>
    %c0_3 = arith.constant 0 : index
    %c0_4 = arith.constant 0 : index
    %2 = vector.load %arg5[%c0_3, %c0_4] : memref<32x1xf32, #tpu.memory_space<vmem>>, vector<32x1xf32>
    %c0_5 = arith.constant 0 : index
    %c0_6 = arith.constant 0 : index
    %3 = vector.load %arg1[%c0_5, %c0_6] : memref<512x24xf32, #tpu.memory_space<vmem>>, vector<512x24xf32>
    %cst = arith.constant dense<0.000000e+00> : vector<32x512xf32>
    %4 = tpu.matmul %0, %3, %cst {dimension_numbers = #tpu.dot_dimension_numbers<[1], [1], [0], [0], [0, 0, 1, 0], [], []>} : vector<32x24xf32>, vector<512x24xf32>, vector<32x512xf32> -> vector<32x512xf32>
    %c0_7 = arith.constant 0 : index
    %c0_8 = arith.constant 0 : index
    %5 = vector.load %arg2[%c0_7, %c0_8] : memref<512x8xf32, #tpu.memory_space<vmem>>, vector<512x8xf32>
    %cst_9 = arith.constant dense<0.000000e+00> : vector<32x512xf32>
    %6 = tpu.matmul %1, %5, %cst_9 {dimension_numbers = #tpu.dot_dimension_numbers<[1], [1], [0], [0], [0, 0, 1, 0], [], []>} : vector<32x8xf32>, vector<512x8xf32>, vector<32x512xf32> -> vector<32x512xf32>
    %7 = arith.addf %4, %6 : vector<32x512xf32>
    %8 = vector.broadcast %2 : vector<32x1xf32> to vector<32x512xf32>
    %9 = arith.addf %7, %8 : vector<32x512xf32>
    %cst_10 = arith.constant 0.000000e+00 : f32
    %10 = vector.broadcast %cst_10 : f32 to vector<32x512xf32>
    %11 = arith.maximumf %9, %10 : vector<32x512xf32>
    %c0_11 = arith.constant 0 : index
    %c0_12 = arith.constant 0 : index
    %12 = vector.load %arg6[%c0_11, %c0_12] : memref<32x32xf32, #tpu.memory_space<vmem>>, vector<32x32xf32>
    %c0_13 = arith.constant 0 : index
    %c0_14 = arith.constant 0 : index
    %13 = vector.load %arg7[%c0_13, %c0_14] : memref<32x1xf32, #tpu.memory_space<vmem>>, vector<32x1xf32>
    %cst_15 = arith.constant dense<0.000000e+00> : vector<32x512xf32>
    %14 = tpu.matmul %12, %11, %cst_15 {dimension_numbers = #tpu.dot_dimension_numbers<[1], [0], [0], [1], [0, 0, 1, 1], [], []>} : vector<32x32xf32>, vector<32x512xf32>, vector<32x512xf32> -> vector<32x512xf32>
    %15 = vector.broadcast %13 : vector<32x1xf32> to vector<32x512xf32>
    %16 = arith.addf %14, %15 : vector<32x512xf32>
    %cst_16 = arith.constant 0.000000e+00 : f32
    %17 = vector.broadcast %cst_16 : f32 to vector<32x512xf32>
    %18 = arith.maximumf %16, %17 : vector<32x512xf32>
    %c0_17 = arith.constant 0 : index
    %c0_18 = arith.constant 0 : index
    %19 = vector.load %arg8[%c0_17, %c0_18] : memref<32x1xf32, #tpu.memory_space<vmem>>, vector<32x1xf32>
    %c0_19 = arith.constant 0 : index
    %c0_20 = arith.constant 0 : index
    %20 = vector.load %arg9[%c0_19, %c0_20] : memref<1x1xf32, #tpu.memory_space<vmem>>, vector<1x1xf32>
    %21 = vector.broadcast %19 : vector<32x1xf32> to vector<32x512xf32>
    %22 = arith.mulf %21, %18 : vector<32x512xf32>
    %cst_21 = arith.constant dense<0.000000e+00> : vector<512xf32>
    %23 = vector.multi_reduction <add>, %22, %cst_21 [0] : vector<32x512xf32> to vector<512xf32>
    %24 = vector.shape_cast %23 : vector<512xf32> to vector<1x512xf32>
    %25 = vector.broadcast %20 : vector<1x1xf32> to vector<1x512xf32>
    %26 = arith.addf %24, %25 : vector<1x512xf32>
    %c0_22 = arith.constant 0 : index
    %c0_23 = arith.constant 0 : index
    %27 = vector.load %arg10[%c0_22, %c0_23] : memref<1x512xf32, #tpu.memory_space<vmem>>, vector<1x512xf32>
    tpu.vector_store %arg10[%c0_22, %c0_23], %26 {strides = array<i32>} : memref<1x512xf32, #tpu.memory_space<vmem>>, vector<1x512xf32>,
    return
  }
  func.func @transform_0(%arg0: i32) -> (i32, i32) {
    %c0_i32 = arith.constant 0 : i32
    %c0_i32_0 = arith.constant 0 : i32
    return %arg0, %c0_i32 : i32, i32
  }
  func.func @transform_1(%arg0: i32) -> (i32, i32) {
    %c0_i32 = arith.constant 0 : i32
    %c0_i32_0 = arith.constant 0 : i32
    return %arg0, %c0_i32 : i32, i32
  }
  func.func @transform_2(%arg0: i32) -> (i32, i32) {
    %c0_i32 = arith.constant 0 : i32
    %c0_i32_0 = arith.constant 0 : i32
    %c0_i32_1 = arith.constant 0 : i32
    return %c0_i32, %c0_i32_0 : i32, i32
  }
  func.func @transform_3(%arg0: i32) -> (i32, i32) {
    %c0_i32 = arith.constant 0 : i32
    %c0_i32_0 = arith.constant 0 : i32
    %c0_i32_1 = arith.constant 0 : i32
    return %c0_i32, %c0_i32_0 : i32, i32
  }
  func.func @transform_4(%arg0: i32) -> (i32, i32) {
    %c0_i32 = arith.constant 0 : i32
    %c0_i32_0 = arith.constant 0 : i32
    %c0_i32_1 = arith.constant 0 : i32
    return %c0_i32, %c0_i32_0 : i32, i32
  }
  func.func @transform_5(%arg0: i32) -> (i32, i32) {
    %c0_i32 = arith.constant 0 : i32
    %c0_i32_0 = arith.constant 0 : i32
    %c0_i32_1 = arith.constant 0 : i32
    return %c0_i32, %c0_i32_0 : i32, i32
  }
  func.func @transform_6(%arg0: i32) -> (i32, i32) {
    %c0_i32 = arith.constant 0 : i32
    %c0_i32_0 = arith.constant 0 : i32
    %c0_i32_1 = arith.constant 0 : i32
    return %c0_i32, %c0_i32_0 : i32, i32
  }
  func.func @transform_7(%arg0: i32) -> (i32, i32) {
    %c0_i32 = arith.constant 0 : i32
    %c0_i32_0 = arith.constant 0 : i32
    %c0_i32_1 = arith.constant 0 : i32
    return %c0_i32, %c0_i32_0 : i32, i32
  }
  func.func @transform_8(%arg0: i32) -> (i32, i32) {
    %c0_i32 = arith.constant 0 : i32
    %c0_i32_0 = arith.constant 0 : i32
    %c0_i32_1 = arith.constant 0 : i32
    return %c0_i32, %c0_i32_0 : i32, i32
  }
  func.func @transform_9(%arg0: i32) -> (i32, i32) {
    %c0_i32 = arith.constant 0 : i32
    %c0_i32_0 = arith.constant 0 : i32
    return %c0_i32, %arg0 : i32, i32
  }
}

</mosaic_0001>

<llo_original>
// kernel: tpu_custom_call.1
$region0: #{tpu_custom_call.1}
  #allocation0 [shape = 'u32[]', space=smem, size = 0x4, offset = 0x4, fixed_abs, tag = 'smem constant byte address 0x4 - core index']
  #allocation1 [shape = 'u32[144,128]{1,0:T(1,128)}', space=vmem, size = 0x12000, scoped, tag = 'internal scratch']
  #allocation2 [shape = 'f32[1,1]{1,0:T(1,128)S(1)}', space=vmem, size = 0x200, scoped, tag = 'scoped memory for tpu_custom_call.1']
  %s0 = inlined_call_operand.vmem [shape: f32[512,24], index: 0, kind: input, shape index: {}]
  %s1 = inlined_call_operand.vmem [shape: f32[512,8], index: 1, kind: input, shape index: {}]
  %s2 = inlined_call_operand.vmem [shape: f32[32,24], index: 2, kind: input, shape index: {}]
  %s3 = inlined_call_operand.vmem [shape: f32[32,8], index: 3, kind: input, shape index: {}]
  %s4 = inlined_call_operand.vmem [shape: f32[32,1], index: 4, kind: input, shape index: {}]
  %s5 = inlined_call_operand.vmem [shape: f32[32,32], index: 5, kind: input, shape index: {}]
  %s6 = inlined_call_operand.vmem [shape: f32[32,1], index: 6, kind: input, shape index: {}]
  %s7 = inlined_call_operand.vmem [shape: f32[32,1], index: 7, kind: input, shape index: {}]
  %s8 = inlined_call_operand.<no memory space> [shape: f32[1,1], index: 8, kind: input, shape index: {}]
  %s9 = inlined_call_operand.hbm [shape: f32[1,512], index: 9, kind: output, shape index: {}]
  %s10 = sld [smem:[#allocation0]]
  $region46: #{tpu_custom_call.1} parent=0
    _
  %s12 = ssub.s32 1, %s10
  %s13 = scalar_select 0, %s12, %s10
  %v14 = vstv %s8
  %15 = vst [vmem:[#allocation2] sm:$0x1] %v14
  $region1: #{tpu_custom_call.1} parent=0
    #allocation3 [shape = 'u8[2048]{0}', space=vmem, size = 0x800, scoped, tag = 'output window, operand 0, single buffered']
    #allocation4 [shape = 's32[1]{0}', space=sflag, size = 0x4, scoped, tag = 'scoped memory for tpu_custom_call.1']
    %16 = vsyncpa [#allocation4], 0
    // Predicated region
    $region2: #{tpu_custom_call.1} parent=1 // pred_check
      _
    $region3: #{tpu_custom_call.1} parent=1 // pred_check_branch
      %18 = sbr.rel (0) target = $region5
    $region4: #{tpu_custom_call.1} parent=1 // pred_region
      _
    $region5: #{tpu_custom_call.1} parent=1 // pred_fallthru
      _
    // Predicated region
    $region6: #{tpu_custom_call.1} parent=1 // pred_check
      _
    $region7: #{tpu_custom_call.1} parent=1 // pred_check_branch
      %20 = sbr.rel (0) target = $region9
    $region8: #{tpu_custom_call.1} parent=1 // pred_region
      _
    $region9: #{tpu_custom_call.1} parent=1 // pred_fallthru
      _
    // Predicated region
    $region10: #{tpu_custom_call.1} parent=1 // pred_check
      _
    $region11: #{tpu_custom_call.1} parent=1 // pred_check_branch
      %22 = sbr.rel (0) target = $region13
    $region12: #{tpu_custom_call.1} parent=1 // pred_region
      _
    $region13: #{tpu_custom_call.1} parent=1 // pred_fallthru
      _
    // Predicated region
    $region14: #{tpu_custom_call.1} parent=1 // pred_check
      _
    $region15: #{tpu_custom_call.1} parent=1 // pred_check_branch
      %24 = sbr.rel (0) target = $region17
    $region16: #{tpu_custom_call.1} parent=1 // pred_region
      _
    $region17: #{tpu_custom_call.1} parent=1 // pred_fallthru
      _
    // Predicated region
    $region18: #{tpu_custom_call.1} parent=1 // pred_check
      _
    $region19: #{tpu_custom_call.1} parent=1 // pred_check_branch
      %26 = sbr.rel (0) target = $region21
    $region20: #{tpu_custom_call.1} parent=1 // pred_region
      _
    $region21: #{tpu_custom_call.1} parent=1 // pred_fallthru
      _
    // Predicated region
    $region22: #{tpu_custom_call.1} parent=1 // pred_check
      _
    $region23: #{tpu_custom_call.1} parent=1 // pred_check_branch
      %28 = sbr.rel (0) target = $region25
    $region24: #{tpu_custom_call.1} parent=1 // pred_region
      _
    $region25: #{tpu_custom_call.1} parent=1 // pred_fallthru
      _
    // Predicated region
    $region26: #{tpu_custom_call.1} parent=1 // pred_check
      _
    $region27: #{tpu_custom_call.1} parent=1 // pred_check_branch
      %30 = sbr.rel (0) target = $region29
    $region28: #{tpu_custom_call.1} parent=1 // pred_region
      _
    $region29: #{tpu_custom_call.1} parent=1 // pred_fallthru
      _
    // Predicated region
    $region30: #{tpu_custom_call.1} parent=1 // pred_check
      _
    $region31: #{tpu_custom_call.1} parent=1 // pred_check_branch
      %32 = sbr.rel (0) target = $region33
    $region32: #{tpu_custom_call.1} parent=1 // pred_region
      _
    $region33: #{tpu_custom_call.1} parent=1 // pred_fallthru
      _
    // Predicated region
    $region34: #{tpu_custom_call.1} parent=1 // pred_check
      _
    $region35: #{tpu_custom_call.1} parent=1 // pred_check_branch
      %34 = sbr.rel (0) target = $region37
    $region36: #{tpu_custom_call.1} parent=1 // pred_region
      _
    $region37: #{tpu_custom_call.1} parent=1 // pred_fallthru
      _
    %v35 = vld [vmem:[%s2] sm:$0xff]
    %v36 = vld [vmem:[%s2 + $0x8] sm:$0xff]
    %v37 = vld [vmem:[%s2 + $0x10] sm:$0xff]
    %v38 = vld [vmem:[%s2 + $0x18] sm:$0xff]
    %v39 = vld [vmem:[%s3] sm:$0xff]
    %v40 = vld [vmem:[%s3 + $0x8] sm:$0xff]
    %v41 = vld [vmem:[%s3 + $0x10] sm:$0xff]
    %v42 = vld [vmem:[%s3 + $0x18] sm:$0xff]
    %v43 = vld [vmem:[%s4] sm:$0xff]
    %v44 = vld [vmem:[%s4 + $0x8] sm:$0xff]
    %v45 = vld [vmem:[%s4 + $0x10] sm:$0xff]
    %v46 = vld [vmem:[%s4 + $0x18] sm:$0xff]
    %v47 = vld [vmem:[%s0] sm:$0xff]
    %v48 = vld [vmem:[%s0 + $0x8] sm:$0xff]
    %v49 = vld [vmem:[%s0 + $0x10] sm:$0xff]
    %v50 = vld [vmem:[%s0 + $0x18] sm:$0xff]
    %v51 = vld [vmem:[%s0 + $0x20] sm:$0xff]
    %v52 = vld [vmem:[%s0 + $0x28] sm:$0xff]
    %v53 = vld [vmem:[%s0 + $0x30] sm:$0xff]
    %v54 = vld [vmem:[%s0 + $0x38] sm:$0xff]
    %v55 = vld [vmem:[%s0 + $0x40] sm:$0xff]
    %v56 = vld [vmem:[%s0 + $0x48] sm:$0xff]
    %v57 = vld [vmem:[%s0 + $0x50] sm:$0xff]
    %v58 = vld [vmem:[%s0 + $0x58] sm:$0xff]
    %v59 = vld [vmem:[%s0 + $0x60] sm:$0xff]
    %v60 = vld [vmem:[%s0 + $0x68] sm:$0xff]
    %v61 = vld [vmem:[%s0 + $0x70] sm:$0xff]
    %v62 = vld [vmem:[%s0 + $0x78] sm:$0xff]
    %v63 = vld [vmem:[%s0 + $0x80] sm:$0xff]
    %v64 = vld [vmem:[%s0 + $0x88] sm:$0xff]
    %v65 = vld [vmem:[%s0 + $0x90] sm:$0xff]
    %v66 = vld [vmem:[%s0 + $0x98] sm:$0xff]
    %v67 = vld [vmem:[%s0 + $0xa0] sm:$0xff]
    %v68 = vld [vmem:[%s0 + $0xa8] sm:$0xff]
    %v69 = vld [vmem:[%s0 + $0xb0] sm:$0xff]
    %v70 = vld [vmem:[%s0 + $0xb8] sm:$0xff]
    %v71 = vld [vmem:[%s0 + $0xc0] sm:$0xff]
    %v72 = vld [vmem:[%s0 + $0xc8] sm:$0xff]
    %v73 = vld [vmem:[%s0 + $0xd0] sm:$0xff]
    %v74 = vld [vmem:[%s0 + $0xd8] sm:$0xff]
    %v75 = vld [vmem:[%s0 + $0xe0] sm:$0xff]
    %v76 = vld [vmem:[%s0 + $0xe8] sm:$0xff]
    %v77 = vld [vmem:[%s0 + $0xf0] sm:$0xff]
    %v78 = vld [vmem:[%s0 + $0xf8] sm:$0xff]
    %v79 = vld [vmem:[%s0 + $0x100] sm:$0xff]
    %v80 = vld [vmem:[%s0 + $0x108] sm:$0xff]
    %v81 = vld [vmem:[%s0 + $0x110] sm:$0xff]
    %v82 = vld [vmem:[%s0 + $0x118] sm:$0xff]
    %v83 = vld [vmem:[%s0 + $0x120] sm:$0xff]
    %v84 = vld [vmem:[%s0 + $0x128] sm:$0xff]
    %v85 = vld [vmem:[%s0 + $0x130] sm:$0xff]
    %v86 = vld [vmem:[%s0 + $0x138] sm:$0xff]
    %v87 = vld [vmem:[%s0 + $0x140] sm:$0xff]
    %v88 = vld [vmem:[%s0 + $0x148] sm:$0xff]
    %v89 = vld [vmem:[%s0 + $0x150] sm:$0xff]
    %v90 = vld [vmem:[%s0 + $0x158] sm:$0xff]
    %v91 = vld [vmem:[%s0 + $0x160] sm:$0xff]
    %v92 = vld [vmem:[%s0 + $0x168] sm:$0xff]
    %v93 = vld [vmem:[%s0 + $0x170] sm:$0xff]
    %v94 = vld [vmem:[%s0 + $0x178] sm:$0xff]
    %v95 = vld [vmem:[%s0 + $0x180] sm:$0xff]
    %v96 = vld [vmem:[%s0 + $0x188] sm:$0xff]
    %v97 = vld [vmem:[%s0 + $0x190] sm:$0xff]
    %v98 = vld [vmem:[%s0 + $0x198] sm:$0xff]
    %v99 = vld [vmem:[%s0 + $0x1a0] sm:$0xff]
    %v100 = vld [vmem:[%s0 + $0x1a8] sm:$0xff]
    %v101 = vld [vmem:[%s0 + $0x1b0] sm:$0xff]
    %v102 = vld [vmem:[%s0 + $0x1b8] sm:$0xff]
    %v103 = vld [vmem:[%s0 + $0x1c0] sm:$0xff]
    %v104 = vld [vmem:[%s0 + $0x1c8] sm:$0xff]
    %v105 = vld [vmem:[%s0 + $0x1d0] sm:$0xff]
    %v106 = vld [vmem:[%s0 + $0x1d8] sm:$0xff]
    %v107 = vld [vmem:[%s0 + $0x1e0] sm:$0xff]
    %v108 = vld [vmem:[%s0 + $0x1e8] sm:$0xff]
    %v109 = vld [vmem:[%s0 + $0x1f0] sm:$0xff]
    %v110 = vld [vmem:[%s0 + $0x1f8] sm:$0xff]
    %v111 = vld [vmem:[%s1] sm:$0xff]
    %v112 = vld [vmem:[%s1 + $0x8] sm:$0xff]
    %v113 = vld [vmem:[%s1 + $0x10] sm:$0xff]
    %v114 = vld [vmem:[%s1 + $0x18] sm:$0xff]
    %v115 = vld [vmem:[%s1 + $0x20] sm:$0xff]
    %v116 = vld [vmem:[%s1 + $0x28] sm:$0xff]
    %v117 = vld [vmem:[%s1 + $0x30] sm:$0xff]
    %v118 = vld [vmem:[%s1 + $0x38] sm:$0xff]
    %v119 = vld [vmem:[%s1 + $0x40] sm:$0xff]
    %v120 = vld [vmem:[%s1 + $0x48] sm:$0xff]
    %v121 = vld [vmem:[%s1 + $0x50] sm:$0xff]
    %v122 = vld [vmem:[%s1 + $0x58] sm:$0xff]
    %v123 = vld [vmem:[%s1 + $0x60] sm:$0xff]
    %v124 = vld [vmem:[%s1 + $0x68] sm:$0xff]
    %v125 = vld [vmem:[%s1 + $0x70] sm:$0xff]
    %v126 = vld [vmem:[%s1 + $0x78] sm:$0xff]
    %v127 = vld [vmem:[%s1 + $0x80] sm:$0xff]
    %v128 = vld [vmem:[%s1 + $0x88] sm:$0xff]
    %v129 = vld [vmem:[%s1 + $0x90] sm:$0xff]
    %v130 = vld [vmem:[%s1 + $0x98] sm:$0xff]
    %v131 = vld [vmem:[%s1 + $0xa0] sm:$0xff]
    %v132 = vld [vmem:[%s1 + $0xa8] sm:$0xff]
    %v133 = vld [vmem:[%s1 + $0xb0] sm:$0xff]
    %v134 = vld [vmem:[%s1 + $0xb8] sm:$0xff]
    %v135 = vld [vmem:[%s1 + $0xc0] sm:$0xff]
    %v136 = vld [vmem:[%s1 + $0xc8] sm:$0xff]
    %v137 = vld [vmem:[%s1 + $0xd0] sm:$0xff]
    %v138 = vld [vmem:[%s1 + $0xd8] sm:$0xff]
    %v139 = vld [vmem:[%s1 + $0xe0] sm:$0xff]
    %v140 = vld [vmem:[%s1 + $0xe8] sm:$0xff]
    %v141 = vld [vmem:[%s1 + $0xf0] sm:$0xff]
    %v142 = vld [vmem:[%s1 + $0xf8] sm:$0xff]
    %v143 = vld [vmem:[%s1 + $0x100] sm:$0xff]
    %v144 = vld [vmem:[%s1 + $0x108] sm:$0xff]
    %v145 = vld [vmem:[%s1 + $0x110] sm:$0xff]
    %v146 = vld [vmem:[%s1 + $0x118] sm:$0xff]
    %v147 = vld [vmem:[%s1 + $0x120] sm:$0xff]
    %v148 = vld [vmem:[%s1 + $0x128] sm:$0xff]
    %v149 = vld [vmem:[%s1 + $0x130] sm:$0xff]
    %v150 = vld [vmem:[%s1 + $0x138] sm:$0xff]
    %v151 = vld [vmem:[%s1 + $0x140] sm:$0xff]
    %v152 = vld [vmem:[%s1 + $0x148] sm:$0xff]
    %v153 = vld [vmem:[%s1 + $0x150] sm:$0xff]
    %v154 = vld [vmem:[%s1 + $0x158] sm:$0xff]
    %v155 = vld [vmem:[%s1 + $0x160] sm:$0xff]
    %v156 = vld [vmem:[%s1 + $0x168] sm:$0xff]
    %v157 = vld [vmem:[%s1 + $0x170] sm:$0xff]
    %v158 = vld [vmem:[%s1 + $0x178] sm:$0xff]
    %v159 = vld [vmem:[%s1 + $0x180] sm:$0xff]
    %v160 = vld [vmem:[%s1 + $0x188] sm:$0xff]
    %v161 = vld [vmem:[%s1 + $0x190] sm:$0xff]
    %v162 = vld [vmem:[%s1 + $0x198] sm:$0xff]
    %v163 = vld [vmem:[%s1 + $0x1a0] sm:$0xff]
    %v164 = vld [vmem:[%s1 + $0x1a8] sm:$0xff]
    %v165 = vld [vmem:[%s1 + $0x1b0] sm:$0xff]
    %v166 = vld [vmem:[%s1 + $0x1b8] sm:$0xff]
    %v167 = vld [vmem:[%s1 + $0x1c0] sm:$0xff]
    %v168 = vld [vmem:[%s1 + $0x1c8] sm:$0xff]
    %v169 = vld [vmem:[%s1 + $0x1d0] sm:$0xff]
    %v170 = vld [vmem:[%s1 + $0x1d8] sm:$0xff]
    %v171 = vld [vmem:[%s1 + $0x1e0] sm:$0xff]
    %v172 = vld [vmem:[%s1 + $0x1e8] sm:$0xff]
    %v173 = vld [vmem:[%s1 + $0x1f0] sm:$0xff]
    %v174 = vld [vmem:[%s1 + $0x1f8] sm:$0xff]
    %vm175 = vcmask 64512
    %v177 = vsel %vm175, %v39, 0
    %v180 = vsel %vm175, %v40, 0
    %v183 = vsel %vm175, %v41, 0
    %v186 = vsel %vm175, %v42, 0
    %v189 = vsel %vm175, %v111, 0
    %v192 = vsel %vm175, %v112, 0
    %v195 = vsel %vm175, %v113, 0
    %v198 = vsel %vm175, %v114, 0
    %v201 = vsel %vm175, %v115, 0
    %v204 = vsel %vm175, %v116, 0
    %v207 = vsel %vm175, %v117, 0
    %v210 = vsel %vm175, %v118, 0
    %v213 = vsel %vm175, %v119, 0
    %v216 = vsel %vm175, %v120, 0
    %v219 = vsel %vm175, %v121, 0
    %v222 = vsel %vm175, %v122, 0
    %v225 = vsel %vm175, %v123, 0
    %v228 = vsel %vm175, %v124, 0
    %v231 = vsel %vm175, %v125, 0
    %v234 = vsel %vm175, %v126, 0
    %v237 = vsel %vm175, %v127, 0
    %v240 = vsel %vm175, %v128, 0
    %v243 = vsel %vm175, %v129, 0
    %v246 = vsel %vm175, %v130, 0
    %v249 = vsel %vm175, %v131, 0
    %v252 = vsel %vm175, %v132, 0
    %v255 = vsel %vm175, %v133, 0
    %v258 = vsel %vm175, %v134, 0
    %v261 = vsel %vm175, %v135, 0
    %v264 = vsel %vm175, %v136, 0
    %v267 = vsel %vm175, %v137, 0
    %v270 = vsel %vm175, %v138, 0
    %v273 = vsel %vm175, %v139, 0
    %v276 = vsel %vm175, %v140, 0
    %v279 = vsel %vm175, %v141, 0
    %v282 = vsel %vm175, %v142, 0
    %v285 = vsel %vm175, %v143, 0
    %v288 = vsel %vm175, %v144, 0
    %v291 = vsel %vm175, %v145, 0
    %v294 = vsel %vm175, %v146, 0
    %v297 = vsel %vm175, %v147, 0
    %v300 = vsel %vm175, %v148, 0
    %v303 = vsel %vm175, %v149, 0
    %v306 = vsel %vm175, %v150, 0
    %v309 = vsel %vm175, %v151, 0
    %v312 = vsel %vm175, %v152, 0
    %v315 = vsel %vm175, %v153, 0
    %v318 = vsel %vm175, %v154, 0
    %v321 = vsel %vm175, %v155, 0
    %v324 = vsel %vm175, %v156, 0
    %v327 = vsel %vm175, %v157, 0
    %v330 = vsel %vm175, %v158, 0
    %v333 = vsel %vm175, %v159, 0
    %v336 = vsel %vm175, %v160, 0
    %v339 = vsel %vm175, %v161, 0
    %v342 = vsel %vm175, %v162, 0
    %v345 = vsel %vm175, %v163, 0
    %v348 = vsel %vm175, %v164, 0
    %v351 = vsel %vm175, %v165, 0
    %v354 = vsel %vm175, %v166, 0
    %v357 = vsel %vm175, %v167, 0
    %v360 = vsel %vm175, %v168, 0
    %v363 = vsel %vm175, %v169, 0
    %v366 = vsel %vm175, %v170, 0
    %v369 = vsel %vm175, %v171, 0
    %v372 = vsel %vm175, %v172, 0
    %v375 = vsel %vm175, %v173, 0
    %v378 = vsel %vm175, %v174, 0
    %380 = vmatprep.subr.mxu0 0.0
    %381 = vmatpush1.xpose.msra.mxu0 %v234
    %382 = vmatprep.subr.mxu0 0.0
    %383 = vmatpush1.xpose.msra.mxu0 %v231
    %384 = vmatprep.subr.mxu0 0.0
    %385 = vmatpush1.xpose.msra.mxu0 %v228
    %386 = vmatprep.subr.mxu0 0.0
    %387 = vmatpush1.xpose.msra.mxu0 %v225
    %388 = vmatprep.subr.mxu0 0.0
    %389 = vmatpush1.xpose.msra.mxu0 %v222
    %390 = vmatprep.subr.mxu0 0.0
    %391 = vmatpush1.xpose.msra.mxu0 %v219
    %392 = vmatprep.subr.mxu0 0.0
    %393 = vmatpush1.xpose.msra.mxu0 %v216
    %394 = vmatprep.subr.mxu0 0.0
    %395 = vmatpush1.xpose.msra.mxu0 %v213
    %396 = vmatprep.subr.mxu0 0.0
    %397 = vmatpush1.xpose.msra.mxu0 %v210
    %398 = vmatprep.subr.mxu0 0.0
    %399 = vmatpush1.xpose.msra.mxu0 %v207
    %400 = vmatprep.subr.mxu0 0.0
    %401 = vmatpush1.xpose.msra.mxu0 %v204
    %402 = vmatprep.subr.mxu0 0.0
    %403 = vmatpush1.xpose.msra.mxu0 %v201
    %404 = vmatprep.subr.mxu0 0.0
    %405 = vmatpush1.xpose.msra.mxu0 %v198
    %406 = vmatprep.subr.mxu0 0.0
    %407 = vmatpush1.xpose.msra.mxu0 %v195
    %408 = vmatprep.subr.mxu0 0.0
    %409 = vmatpush1.xpose.msra.mxu0 %v192
    %410 = vmatprep.subr.mxu0 0.0
    %411 = vmatpush1.xpose.msra.mxu0 %v189
    %412 = vmatprep.subr.mxu0 0.0
    %413 = vmatpush2.xpose.msra.mxu0 %v282
    %414 = vmatprep.subr.mxu0 0.0
    %415 = vmatpush2.xpose.msra.mxu0 %v279
    %416 = vmatprep.subr.mxu0 0.0
    %417 = vmatpush2.xpose.msra.mxu0 %v276
    %418 = vmatprep.subr.mxu0 0.0
    %419 = vmatpush2.xpose.msra.mxu0 %v273
    %420 = vmatprep.subr.mxu0 0.0
    %421 = vmatpush2.xpose.msra.mxu0 %v270
    %422 = vmatprep.subr.mxu0 0.0
    %423 = vmatpush2.xpose.msra.mxu0 %v267
    %424 = vmatprep.subr.mxu0 0.0
    %425 = vmatpush2.xpose.msra.mxu0 %v264
    %426 = vmatprep.subr.mxu0 0.0
    %427 = vmatpush2.xpose.msra.mxu0 %v261
    %428 = vmatprep.subr.mxu0 0.0
    %429 = vmatpush2.xpose.msra.mxu0 %v258
    %430 = vmatprep.subr.mxu0 0.0
    %431 = vmatpush2.xpose.msra.mxu0 %v255
    %432 = vmatprep.subr.mxu0 0.0
    %433 = vmatpush2.xpose.msra.mxu0 %v252
    %434 = vmatprep.subr.mxu0 0.0
    %435 = vmatpush2.xpose.msra.mxu0 %v249
    %436 = vmatprep.subr.mxu0 0.0
    %437 = vmatpush2.xpose.msra.mxu0 %v246
    %438 = vmatprep.subr.mxu0 0.0
    %439 = vmatpush2.xpose.msra.mxu0 %v243
    %440 = vmatprep.subr.mxu0 0.0
    %441 = vmatpush2.xpose.msra.mxu0 %v240
    %442 = vmatprep.subr.mxu0 0.0
    %443 = vmatpush2.xpose.msra.mxu0 %v237
    %444 = vmatprep.mubr.f32.mxu0 0.0
    %445 = vmatmul.mubr.f32.gmra.mxu0 %v177
    %v446 = vpop.f32.mrf.mxu0
    %v447 = vadd.f32 0.0, %v446
    %v448 = vpop.f32.mrf.mxu0
    %v449 = vadd.f32 0.0, %v448
    %450 = vmatprep.mubr.f32.mxu0 0.0
    %451 = vmatmul.mubr.f32.gmra.mxu0 %v180
    %v452 = vpop.f32.mrf.mxu0
    %v453 = vadd.f32 0.0, %v452
    %v454 = vpop.f32.mrf.mxu0
    %v455 = vadd.f32 0.0, %v454
    %456 = vmatprep.mubr.f32.mxu0 0.0
    %457 = vmatmul.mubr.f32.gmra.mxu0 %v183
    %v458 = vpop.f32.mrf.mxu0
    %v459 = vadd.f32 0.0, %v458
    %v460 = vpop.f32.mrf.mxu0
    %v461 = vadd.f32 0.0, %v460
    %462 = vmatprep.mubr.f32.mxu0 0.0
    %463 = vmatmul.mubr.f32.gmra.mxu0 %v186
    %v464 = vpop.f32.mrf.mxu0
    %v465 = vadd.f32 0.0, %v464
    %v466 = vpop.f32.mrf.mxu0
    %v467 = vadd.f32 0.0, %v466
    %468 = vdwg.mxu0
    %469 = vmatprep.subr.mxu0 0.0
    %470 = vmatpush1.xpose.msra.mxu0 %v330
    %471 = vmatprep.subr.mxu0 0.0
    %472 = vmatpush1.xpose.msra.mxu0 %v327
    %473 = vmatprep.subr.mxu0 0.0
    %474 = vmatpush1.xpose.msra.mxu0 %v324
    %475 = vmatprep.subr.mxu0 0.0
    %476 = vmatpush1.xpose.msra.mxu0 %v321
    %477 = vmatprep.subr.mxu0 0.0
    %478 = vmatpush1.xpose.msra.mxu0 %v318
    %479 = vmatprep.subr.mxu0 0.0
    %480 = vmatpush1.xpose.msra.mxu0 %v315
    %481 = vmatprep.subr.mxu0 0.0
    %482 = vmatpush1.xpose.msra.mxu0 %v312
    %483 = vmatprep.subr.mxu0 0.0
    %484 = vmatpush1.xpose.msra.mxu0 %v309
    %485 = vmatprep.subr.mxu0 0.0
    %486 = vmatpush1.xpose.msra.mxu0 %v306
    %487 = vmatprep.subr.mxu0 0.0
    %488 = vmatpush1.xpose.msra.mxu0 %v303
    %489 = vmatprep.subr.mxu0 0.0
    %490 = vmatpush1.xpose.msra.mxu0 %v300
    %491 = vmatprep.subr.mxu0 0.0
    %492 = vmatpush1.xpose.msra.mxu0 %v297
    %493 = vmatprep.subr.mxu0 0.0
    %494 = vmatpush1.xpose.msra.mxu0 %v294
    %495 = vmatprep.subr.mxu0 0.0
    %496 = vmatpush1.xpose.msra.mxu0 %v291
    %497 = vmatprep.subr.mxu0 0.0
    %498 = vmatpush1.xpose.msra.mxu0 %v288
    %499 = vmatprep.subr.mxu0 0.0
    %500 = vmatpush1.xpose.msra.mxu0 %v285
    %501 = vmatprep.subr.mxu0 0.0
    %502 = vmatpush2.xpose.msra.mxu0 %v378
    %503 = vmatprep.subr.mxu0 0.0
    %504 = vmatpush2.xpose.msra.mxu0 %v375
    %505 = vmatprep.subr.mxu0 0.0
    %506 = vmatpush2.xpose.msra.mxu0 %v372
    %507 = vmatprep.subr.mxu0 0.0
    %508 = vmatpush2.xpose.msra.mxu0 %v369
    %509 = vmatprep.subr.mxu0 0.0
    %510 = vmatpush2.xpose.msra.mxu0 %v366
    %511 = vmatprep.subr.mxu0 0.0
    %512 = vmatpush2.xpose.msra.mxu0 %v363
    %513 = vmatprep.subr.mxu0 0.0
    %514 = vmatpush2.xpose.msra.mxu0 %v360
    %515 = vmatprep.subr.mxu0 0.0
    %516 = vmatpush2.xpose.msra.mxu0 %v357
    %517 = vmatprep.subr.mxu0 0.0
    %518 = vmatpush2.xpose.msra.mxu0 %v354
    %519 = vmatprep.subr.mxu0 0.0
    %520 = vmatpush2.xpose.msra.mxu0 %v351
    %521 = vmatprep.subr.mxu0 0.0
    %522 = vmatpush2.xpose.msra.mxu0 %v348
    %523 = vmatprep.subr.mxu0 0.0
    %524 = vmatpush2.xpose.msra.mxu0 %v345
    %525 = vmatprep.subr.mxu0 0.0
    %526 = vmatpush2.xpose.msra.mxu0 %v342
    %527 = vmatprep.subr.mxu0 0.0
    %528 = vmatpush2.xpose.msra.mxu0 %v339
    %529 = vmatprep.subr.mxu0 0.0
    %530 = vmatpush2.xpose.msra.mxu0 %v336
    %531 = vmatprep.subr.mxu0 0.0
    %532 = vmatpush2.xpose.msra.mxu0 %v333
    %533 = vmatprep.mubr.f32.mxu0 0.0
    %534 = vmatmul.mubr.f32.gmra.mxu0 %v177
    %v535 = vpop.f32.mrf.mxu0
    %v536 = vadd.f32 0.0, %v535
    %v537 = vpop.f32.mrf.mxu0
    %v538 = vadd.f32 0.0, %v537
    %539 = vmatprep.mubr.f32.mxu0 0.0
    %540 = vmatmul.mubr.f32.gmra.mxu0 %v180
    %v541 = vpop.f32.mrf.mxu0
    %v542 = vadd.f32 0.0, %v541
    %v543 = vpop.f32.mrf.mxu0
    %v544 = vadd.f32 0.0, %v543
    %545 = vmatprep.mubr.f32.mxu0 0.0
    %546 = vmatmul.mubr.f32.gmra.mxu0 %v183
    %v547 = vpop.f32.mrf.mxu0
    %v548 = vadd.f32 0.0, %v547
    %v549 = vpop.f32.mrf.mxu0
    %v550 = vadd.f32 0.0, %v549
    %551 = vmatprep.mubr.f32.mxu0 0.0
    %552 = vmatmul.mubr.f32.gmra.mxu0 %v186
    %v553 = vpop.f32.mrf.mxu0
    %v554 = vadd.f32 0.0, %v553
    %v555 = vpop.f32.mrf.mxu0
    %v556 = vadd.f32 0.0, %v555
    %557 = vdwg.mxu0
    %vm558 = vcmask 195584
    %v560 = vsel %vm558, %v35, 0
    %v563 = vsel %vm558, %v36, 0
    %v566 = vsel %vm558, %v37, 0
    %v569 = vsel %vm558, %v38, 0
    %v572 = vsel %vm558, %v47, 0
    %v575 = vsel %vm558, %v48, 0
    %v578 = vsel %vm558, %v49, 0
    %v581 = vsel %vm558, %v50, 0
    %v584 = vsel %vm558, %v51, 0
    %v587 = vsel %vm558, %v52, 0
    %v590 = vsel %vm558, %v53, 0
    %v593 = vsel %vm558, %v54, 0
    %v596 = vsel %vm558, %v55, 0
    %v599 = vsel %vm558, %v56, 0
    %v602 = vsel %vm558, %v57, 0
    %v605 = vsel %vm558, %v58, 0
    %v608 = vsel %vm558, %v59, 0
    %v611 = vsel %vm558, %v60, 0
    %v614 = vsel %vm558, %v61, 0
    %v617 = vsel %vm558, %v62, 0
    %v620 = vsel %vm558, %v63, 0
    %v623 = vsel %vm558, %v64, 0
    %v626 = vsel %vm558, %v65, 0
    %v629 = vsel %vm558, %v66, 0
    %v632 = vsel %vm558, %v67, 0
    %v635 = vsel %vm558, %v68, 0
    %v638 = vsel %vm558, %v69, 0
    %v641 = vsel %vm558, %v70, 0
    %v644 = vsel %vm558, %v71, 0
    %v647 = vsel %vm558, %v72, 0
    %v650 = vsel %vm558, %v73, 0
    %v653 = vsel %vm558, %v74, 0
    %v656 = vsel %vm558, %v75, 0
    %v659 = vsel %vm558, %v76, 0
    %v662 = vsel %vm558, %v77, 0
    %v665 = vsel %vm558, %v78, 0
    %v668 = vsel %vm558, %v79, 0
    %v671 = vsel %vm558, %v80, 0
    %v674 = vsel %vm558, %v81, 0
    %v677 = vsel %vm558, %v82, 0
    %v680 = vsel %vm558, %v83, 0
    %v683 = vsel %vm558, %v84, 0
    %v686 = vsel %vm558, %v85, 0
    %v689 = vsel %vm558, %v86, 0
    %v692 = vsel %vm558, %v87, 0
    %v695 = vsel %vm558, %v88, 0
    %v698 = vsel %vm558, %v89, 0
    %v701 = vsel %vm558, %v90, 0
    %v704 = vsel %vm558, %v91, 0
    %v707 = vsel %vm558, %v92, 0
    %v710 = vsel %vm558, %v93, 0
    %v713 = vsel %vm558, %v94, 0
    %v716 = vsel %vm558, %v95, 0
    %v719 = vsel %vm558, %v96, 0
    %v722 = vsel %vm558, %v97, 0
    %v725 = vsel %vm558, %v98, 0
    %v728 = vsel %vm558, %v99, 0
    %v731 = vsel %vm558, %v100, 0
    %v734 = vsel %vm558, %v101, 0
    %v737 = vsel %vm558, %v102, 0
    %v740 = vsel %vm558, %v103, 0
    %v743 = vsel %vm558, %v104, 0
    %v746 = vsel %vm558, %v105, 0
    %v749 = vsel %vm558, %v106, 0
    %v752 = vsel %vm558, %v107, 0
    %v755 = vsel %vm558, %v108, 0
    %v758 = vsel %vm558, %v109, 0
    %v761 = vsel %vm558, %v110, 0
    %763 = vmatprep.subr.mxu0 0.0
    %764 = vmatpush1.xpose.msra.mxu0 %v617
    %765 = vmatprep.subr.mxu0 0.0
    %766 = vmatpush1.xpose.msra.mxu0 %v614
    %767 = vmatprep.subr.mxu0 0.0
    %768 = vmatpush1.xpose.msra.mxu0 %v611
    %769 = vmatprep.subr.mxu0 0.0
    %770 = vmatpush1.xpose.msra.mxu0 %v608
    %771 = vmatprep.subr.mxu0 0.0
    %772 = vmatpush1.xpose.msra.mxu0 %v605
    %773 = vmatprep.subr.mxu0 0.0
    %774 = vmatpush1.xpose.msra.mxu0 %v602
    %775 = vmatprep.subr.mxu0 0.0
    %776 = vmatpush1.xpose.msra.mxu0 %v599
    %777 = vmatprep.subr.mxu0 0.0
    %778 = vmatpush1.xpose.msra.mxu0 %v596
    %779 = vmatprep.subr.mxu0 0.0
    %780 = vmatpush1.xpose.msra.mxu0 %v593
    %781 = vmatprep.subr.mxu0 0.0
    %782 = vmatpush1.xpose.msra.mxu0 %v590
    %783 = vmatprep.subr.mxu0 0.0
    %784 = vmatpush1.xpose.msra.mxu0 %v587
    %785 = vmatprep.subr.mxu0 0.0
    %786 = vmatpush1.xpose.msra.mxu0 %v584
    %787 = vmatprep.subr.mxu0 0.0
    %788 = vmatpush1.xpose.msra.mxu0 %v581
    %789 = vmatprep.subr.mxu0 0.0
    %790 = vmatpush1.xpose.msra.mxu0 %v578
    %791 = vmatprep.subr.mxu0 0.0
    %792 = vmatpush1.xpose.msra.mxu0 %v575
    %793 = vmatprep.subr.mxu0 0.0
    %794 = vmatpush1.xpose.msra.mxu0 %v572
    %795 = vmatprep.subr.mxu0 0.0
    %796 = vmatpush2.xpose.msra.mxu0 %v665
    %797 = vmatprep.subr.mxu0 0.0
    %798 = vmatpush2.xpose.msra.mxu0 %v662
    %799 = vmatprep.subr.mxu0 0.0
    %800 = vmatpush2.xpose.msra.mxu0 %v659
    %801 = vmatprep.subr.mxu0 0.0
    %802 = vmatpush2.xpose.msra.mxu0 %v656
    %803 = vmatprep.subr.mxu0 0.0
    %804 = vmatpush2.xpose.msra.mxu0 %v653
    %805 = vmatprep.subr.mxu0 0.0
    %806 = vmatpush2.xpose.msra.mxu0 %v650
    %807 = vmatprep.subr.mxu0 0.0
    %808 = vmatpush2.xpose.msra.mxu0 %v647
    %809 = vmatprep.subr.mxu0 0.0
    %810 = vmatpush2.xpose.msra.mxu0 %v644
    %811 = vmatprep.subr.mxu0 0.0
    %812 = vmatpush2.xpose.msra.mxu0 %v641
    %813 = vmatprep.subr.mxu0 0.0
    %814 = vmatpush2.xpose.msra.mxu0 %v638
    %815 = vmatprep.subr.mxu0 0.0
    %816 = vmatpush2.xpose.msra.mxu0 %v635
    %817 = vmatprep.subr.mxu0 0.0
    %818 = vmatpush2.xpose.msra.mxu0 %v632
    %819 = vmatprep.subr.mxu0 0.0
    %820 = vmatpush2.xpose.msra.mxu0 %v629
    %821 = vmatprep.subr.mxu0 0.0
    %822 = vmatpush2.xpose.msra.mxu0 %v626
    %823 = vmatprep.subr.mxu0 0.0
    %824 = vmatpush2.xpose.msra.mxu0 %v623
    %825 = vmatprep.subr.mxu0 0.0
    %826 = vmatpush2.xpose.msra.mxu0 %v620
    %827 = vmatprep.mubr.f32.mxu0 0.0
    %828 = vmatmul.mubr.f32.gmra.mxu0 %v560
    %v829 = vpop.f32.mrf.mxu0
    %v830 = vadd.f32 %v447, %v829
    %v831 = vpop.f32.mrf.mxu0
    %v832 = vadd.f32 %v449, %v831
    %833 = vmatprep.mubr.f32.mxu0 0.0
    %834 = vmatmul.mubr.f32.gmra.mxu0 %v563
    %v835 = vpop.f32.mrf.mxu0
    %v836 = vadd.f32 %v453, %v835
    %v837 = vpop.f32.mrf.mxu0
    %v838 = vadd.f32 %v455, %v837
    %839 = vmatprep.mubr.f32.mxu0 0.0
    %840 = vmatmul.mubr.f32.gmra.mxu0 %v566
    %v841 = vpop.f32.mrf.mxu0
    %v842 = vadd.f32 %v459, %v841
    %v843 = vpop.f32.mrf.mxu0
    %v844 = vadd.f32 %v461, %v843
    %845 = vmatprep.mubr.f32.mxu0 0.0
    %846 = vmatmul.mubr.f32.gmra.mxu0 %v569
    %v847 = vpop.f32.mrf.mxu0
    %v848 = vadd.f32 %v465, %v847
    %v849 = vpop.f32.mrf.mxu0
    %v850 = vadd.f32 %v467, %v849
    %851 = vdwg.mxu0
    %852 = vmatprep.subr.mxu0 0.0
    %853 = vmatpush1.xpose.msra.mxu0 %v713
    %854 = vmatprep.subr.mxu0 0.0
    %855 = vmatpush1.xpose.msra.mxu0 %v710
    %856 = vmatprep.subr.mxu0 0.0
    %857 = vmatpush1.xpose.msra.mxu0 %v707
    %858 = vmatprep.subr.mxu0 0.0
    %859 = vmatpush1.xpose.msra.mxu0 %v704
    %860 = vmatprep.subr.mxu0 0.0
    %861 = vmatpush1.xpose.msra.mxu0 %v701
    %862 = vmatprep.subr.mxu0 0.0
    %863 = vmatpush1.xpose.msra.mxu0 %v698
    %864 = vmatprep.subr.mxu0 0.0
    %865 = vmatpush1.xpose.msra.mxu0 %v695
    %866 = vmatprep.subr.mxu0 0.0
    %867 = vmatpush1.xpose.msra.mxu0 %v692
    %868 = vmatprep.subr.mxu0 0.0
    %869 = vmatpush1.xpose.msra.mxu0 %v689
    %870 = vmatprep.subr.mxu0 0.0
    %871 = vmatpush1.xpose.msra.mxu0 %v686
    %872 = vmatprep.subr.mxu0 0.0
    %873 = vmatpush1.xpose.msra.mxu0 %v683
    %874 = vmatprep.subr.mxu0 0.0
    %875 = vmatpush1.xpose.msra.mxu0 %v680
    %876 = vmatprep.subr.mxu0 0.0
    %877 = vmatpush1.xpose.msra.mxu0 %v677
    %878 = vmatprep.subr.mxu0 0.0
    %879 = vmatpush1.xpose.msra.mxu0 %v674
    %880 = vmatprep.subr.mxu0 0.0
    %881 = vmatpush1.xpose.msra.mxu0 %v671
    %882 = vmatprep.subr.mxu0 0.0
    %883 = vmatpush1.xpose.msra.mxu0 %v668
    %884 = vmatprep.subr.mxu0 0.0
    %885 = vmatpush2.xpose.msra.mxu0 %v761
    %886 = vmatprep.subr.mxu0 0.0
    %887 = vmatpush2.xpose.msra.mxu0 %v758
    %888 = vmatprep.subr.mxu0 0.0
    %889 = vmatpush2.xpose.msra.mxu0 %v755
    %890 = vmatprep.subr.mxu0 0.0
    %891 = vmatpush2.xpose.msra.mxu0 %v752
    %892 = vmatprep.subr.mxu0 0.0
    %893 = vmatpush2.xpose.msra.mxu0 %v749
    %894 = vmatprep.subr.mxu0 0.0
    %895 = vmatpush2.xpose.msra.mxu0 %v746
    %896 = vmatprep.subr.mxu0 0.0
    %897 = vmatpush2.xpose.msra.mxu0 %v743
    %898 = vmatprep.subr.mxu0 0.0
    %899 = vmatpush2.xpose.msra.mxu0 %v740
    %900 = vmatprep.subr.mxu0 0.0
    %901 = vmatpush2.xpose.msra.mxu0 %v737
    %902 = vmatprep.subr.mxu0 0.0
    %903 = vmatpush2.xpose.msra.mxu0 %v734
    %904 = vmatprep.subr.mxu0 0.0
    %905 = vmatpush2.xpose.msra.mxu0 %v731
    %906 = vmatprep.subr.mxu0 0.0
    %907 = vmatpush2.xpose.msra.mxu0 %v728
    %908 = vmatprep.subr.mxu0 0.0
    %909 = vmatpush2.xpose.msra.mxu0 %v725
    %910 = vmatprep.subr.mxu0 0.0
    %911 = vmatpush2.xpose.msra.mxu0 %v722
    %912 = vmatprep.subr.mxu0 0.0
    %913 = vmatpush2.xpose.msra.mxu0 %v719
    %914 = vmatprep.subr.mxu0 0.0
    %915 = vmatpush2.xpose.msra.mxu0 %v716
    %916 = vmatprep.mubr.f32.mxu0 0.0
    %917 = vmatmul.mubr.f32.gmra.mxu0 %v560
    %v918 = vpop.f32.mrf.mxu0
    %v919 = vadd.f32 %v536, %v918
    %v920 = vpop.f32.mrf.mxu0
    %v921 = vadd.f32 %v538, %v920
    %922 = vmatprep.mubr.f32.mxu0 0.0
    %923 = vmatmul.mubr.f32.gmra.mxu0 %v563
    %v924 = vpop.f32.mrf.mxu0
    %v925 = vadd.f32 %v542, %v924
    %v926 = vpop.f32.mrf.mxu0
    %v927 = vadd.f32 %v544, %v926
    %928 = vmatprep.mubr.f32.mxu0 0.0
    %929 = vmatmul.mubr.f32.gmra.mxu0 %v566
    %v930 = vpop.f32.mrf.mxu0
    %v931 = vadd.f32 %v548, %v930
    %v932 = vpop.f32.mrf.mxu0
    %v933 = vadd.f32 %v550, %v932
    %934 = vmatprep.mubr.f32.mxu0 0.0
    %935 = vmatmul.mubr.f32.gmra.mxu0 %v569
    %v936 = vpop.f32.mrf.mxu0
    %v937 = vadd.f32 %v554, %v936
    %v938 = vpop.f32.mrf.mxu0
    %v939 = vadd.f32 %v556, %v938
    %940 = vdwg.mxu0
    %942 = vset.pattern.permute.xlu0 0
    %943 = vperm.xlu0 %942, %v43
    %v944 = vpop.permute.xlu0 %943
    %947 = vset.pattern.permute.xlu0 0
    %948 = vperm.xlu0 %947, %v44
    %v949 = vpop.permute.xlu0 %948
    %952 = vset.pattern.permute.xlu0 0
    %953 = vperm.xlu0 %952, %v45
    %v954 = vpop.permute.xlu0 %953
    %957 = vset.pattern.permute.xlu0 0
    %958 = vperm.xlu0 %957, %v46
    %v959 = vpop.permute.xlu0 %958
    %v961 = vadd.f32 %v830, %v944
    %v962 = vadd.f32 %v832, %v944
    %v963 = vadd.f32 %v919, %v944
    %v964 = vadd.f32 %v921, %v944
    %v965 = vadd.f32 %v836, %v949
    %v966 = vadd.f32 %v838, %v949
    %v967 = vadd.f32 %v925, %v949
    %v968 = vadd.f32 %v927, %v949
    %v969 = vadd.f32 %v842, %v954
    %v970 = vadd.f32 %v844, %v954
    %v971 = vadd.f32 %v931, %v954
    %v972 = vadd.f32 %v933, %v954
    %v973 = vadd.f32 %v848, %v959
    %v974 = vadd.f32 %v850, %v959
    %v975 = vadd.f32 %v937, %v959
    %v976 = vadd.f32 %v939, %v959
    %v977 = vmax.f32 %v961, 0.0
    %v978 = vmax.f32 %v962, 0.0
    %v979 = vmax.f32 %v963, 0.0
    %v980 = vmax.f32 %v964, 0.0
    %v981 = vmax.f32 %v965, 0.0
    %v982 = vmax.f32 %v966, 0.0
    %v983 = vmax.f32 %v967, 0.0
    %v984 = vmax.f32 %v968, 0.0
    %v985 = vmax.f32 %v969, 0.0
    %v986 = vmax.f32 %v970, 0.0
    %v987 = vmax.f32 %v971, 0.0
    %v988 = vmax.f32 %v972, 0.0
    %v989 = vmax.f32 %v973, 0.0
    %v990 = vmax.f32 %v974, 0.0
    %v991 = vmax.f32 %v975, 0.0
    %v992 = vmax.f32 %v976, 0.0
    %v993 = vld [vmem:[%s5] sm:$0xff]
    %v994 = vld [vmem:[%s5 + $0x8] sm:$0xff]
    %v995 = vld [vmem:[%s5 + $0x10] sm:$0xff]
    %v996 = vld [vmem:[%s5 + $0x18] sm:$0xff]
    %v997 = vld [vmem:[%s6] sm:$0xff]
    %v998 = vld [vmem:[%s6 + $0x8] sm:$0xff]
    %v999 = vld [vmem:[%s6 + $0x10] sm:$0xff]
    %v1000 = vld [vmem:[%s6 + $0x18] sm:$0xff]
    %1002 = vset.pattern.permute.xlu0 0
    %1003 = vperm.xlu0 %1002, %v997
    %v1004 = vpop.permute.xlu0 %1003
    %1007 = vset.pattern.permute.xlu0 0
    %1008 = vperm.xlu0 %1007, %v998
    %v1009 = vpop.permute.xlu0 %1008
    %1012 = vset.pattern.permute.xlu0 0
    %1013 = vperm.xlu0 %1012, %v999
    %v1014 = vpop.permute.xlu0 %1013
    %1017 = vset.pattern.permute.xlu0 0
    %1018 = vperm.xlu0 %1017, %v1000
    %v1019 = vpop.permute.xlu0 %1018
    %vm1021 = vcmask 261120
    %v1023 = vsel %vm1021, %v993, 0
    %v1026 = vsel %vm1021, %v994, 0
    %v1029 = vsel %vm1021, %v995, 0
    %v1032 = vsel %vm1021, %v996, 0
    %1034 = vmatprep.subr.mxu0 0.0
    %1035 = vmatpush1.msra.mxu0 0.0
    %1036 = vmatprep.subr.mxu0 0.0
    %1037 = vmatpush1.msra.mxu0 0.0
    %1038 = vmatprep.subr.mxu0 0.0
    %1039 = vmatpush1.msra.mxu0 0.0
    %1040 = vmatprep.subr.mxu0 0.0
    %1041 = vmatpush1.msra.mxu0 0.0
    %1042 = vmatprep.subr.mxu0 0.0
    %1043 = vmatpush1.msra.mxu0 0.0
    %1044 = vmatprep.subr.mxu0 0.0
    %1045 = vmatpush1.msra.mxu0 0.0
    %1046 = vmatprep.subr.mxu0 0.0
    %1047 = vmatpush1.msra.mxu0 0.0
    %1048 = vmatprep.subr.mxu0 0.0
    %1049 = vmatpush1.msra.mxu0 0.0
    %1050 = vmatprep.subr.mxu0 0.0
    %1051 = vmatpush1.msra.mxu0 0.0
    %1052 = vmatprep.subr.mxu0 0.0
    %1053 = vmatpush1.msra.mxu0 0.0
    %1054 = vmatprep.subr.mxu0 0.0
    %1055 = vmatpush1.msra.mxu0 0.0
    %1056 = vmatprep.subr.mxu0 0.0
    %1057 = vmatpush1.msra.mxu0 0.0
    %1058 = vmatprep.subr.mxu0 %v990
    %1059 = vmatpush1.msra.mxu0 %v989
    %1060 = vmatprep.subr.mxu0 %v986
    %1061 = vmatpush1.msra.mxu0 %v985
    %1062 = vmatprep.subr.mxu0 %v982
    %1063 = vmatpush1.msra.mxu0 %v981
    %1064 = vmatprep.subr.mxu0 %v978
    %1065 = vmatpush1.msra.mxu0 %v977
    %1066 = vmatprep.subr.mxu0 0.0
    %1067 = vmatpush2.msra.mxu0 0.0
    %1068 = vmatprep.subr.mxu0 0.0
    %1069 = vmatpush2.msra.mxu0 0.0
    %1070 = vmatprep.subr.mxu0 0.0
    %1071 = vmatpush2.msra.mxu0 0.0
    %1072 = vmatprep.subr.mxu0 0.0
    %1073 = vmatpush2.msra.mxu0 0.0
    %1074 = vmatprep.subr.mxu0 0.0
    %1075 = vmatpush2.msra.mxu0 0.0
    %1076 = vmatprep.subr.mxu0 0.0
    %1077 = vmatpush2.msra.mxu0 0.0
    %1078 = vmatprep.subr.mxu0 0.0
    %1079 = vmatpush2.msra.mxu0 0.0
    %1080 = vmatprep.subr.mxu0 0.0
    %1081 = vmatpush2.msra.mxu0 0.0
    %1082 = vmatprep.subr.mxu0 0.0
    %1083 = vmatpush2.msra.mxu0 0.0
    %1084 = vmatprep.subr.mxu0 0.0
    %1085 = vmatpush2.msra.mxu0 0.0
    %1086 = vmatprep.subr.mxu0 0.0
    %1087 = vmatpush2.msra.mxu0 0.0
    %1088 = vmatprep.subr.mxu0 0.0
    %1089 = vmatpush2.msra.mxu0 0.0
    %1090 = vmatprep.subr.mxu0 0.0
    %1091 = vmatpush2.msra.mxu0 0.0
    %1092 = vmatprep.subr.mxu0 0.0
    %1093 = vmatpush2.msra.mxu0 0.0
    %1094 = vmatprep.subr.mxu0 0.0
    %1095 = vmatpush2.msra.mxu0 0.0
    %1096 = vmatprep.subr.mxu0 0.0
    %1097 = vmatpush2.msra.mxu0 0.0
    %1098 = vmatprep.mubr.f32.mxu0 0.0
    %1099 = vmatmul.mubr.f32.gmra.mxu0 %v1023
    %v1100 = vpop.f32.mrf.mxu0
    %v1101 = vadd.f32 %v1004, %v1100
    %v1102 = vpop.f32.mrf.mxu0
    %v1103 = vadd.f32 %v1004, %v1102
    %1104 = vmatprep.mubr.f32.mxu0 0.0
    %1105 = vmatmul.mubr.f32.gmra.mxu0 %v1026
    %v1106 = vpop.f32.mrf.mxu0
    %v1107 = vadd.f32 %v1009, %v1106
    %v1108 = vpop.f32.mrf.mxu0
    %v1109 = vadd.f32 %v1009, %v1108
    %1110 = vmatprep.mubr.f32.mxu0 0.0
    %1111 = vmatmul.mubr.f32.gmra.mxu0 %v1029
    %v1112 = vpop.f32.mrf.mxu0
    %v1113 = vadd.f32 %v1014, %v1112
    %v1114 = vpop.f32.mrf.mxu0
    %v1115 = vadd.f32 %v1014, %v1114
    %1116 = vmatprep.mubr.f32.mxu0 0.0
    %1117 = vmatmul.mubr.f32.gmra.mxu0 %v1032
    %v1118 = vpop.f32.mrf.mxu0
    %v1119 = vadd.f32 %v1019, %v1118
    %v1120 = vpop.f32.mrf.mxu0
    %v1121 = vadd.f32 %v1019, %v1120
    %1122 = vdwg.mxu0
    %1123 = vmatprep.subr.mxu0 0.0
    %1124 = vmatpush1.msra.mxu0 0.0
    %1125 = vmatprep.subr.mxu0 0.0
    %1126 = vmatpush1.msra.mxu0 0.0
    %1127 = vmatprep.subr.mxu0 0.0
    %1128 = vmatpush1.msra.mxu0 0.0
    %1129 = vmatprep.subr.mxu0 0.0
    %1130 = vmatpush1.msra.mxu0 0.0
    %1131 = vmatprep.subr.mxu0 0.0
    %1132 = vmatpush1.msra.mxu0 0.0
    %1133 = vmatprep.subr.mxu0 0.0
    %1134 = vmatpush1.msra.mxu0 0.0
    %1135 = vmatprep.subr.mxu0 0.0
    %1136 = vmatpush1.msra.mxu0 0.0
    %1137 = vmatprep.subr.mxu0 0.0
    %1138 = vmatpush1.msra.mxu0 0.0
    %1139 = vmatprep.subr.mxu0 0.0
    %1140 = vmatpush1.msra.mxu0 0.0
    %1141 = vmatprep.subr.mxu0 0.0
    %1142 = vmatpush1.msra.mxu0 0.0
    %1143 = vmatprep.subr.mxu0 0.0
    %1144 = vmatpush1.msra.mxu0 0.0
    %1145 = vmatprep.subr.mxu0 0.0
    %1146 = vmatpush1.msra.mxu0 0.0
    %1147 = vmatprep.subr.mxu0 %v992
    %1148 = vmatpush1.msra.mxu0 %v991
    %1149 = vmatprep.subr.mxu0 %v988
    %1150 = vmatpush1.msra.mxu0 %v987
    %1151 = vmatprep.subr.mxu0 %v984
    %1152 = vmatpush1.msra.mxu0 %v983
    %1153 = vmatprep.subr.mxu0 %v980
    %1154 = vmatpush1.msra.mxu0 %v979
    %1155 = vmatprep.subr.mxu0 0.0
    %1156 = vmatpush2.msra.mxu0 0.0
    %1157 = vmatprep.subr.mxu0 0.0
    %1158 = vmatpush2.msra.mxu0 0.0
    %1159 = vmatprep.subr.mxu0 0.0
    %1160 = vmatpush2.msra.mxu0 0.0
    %1161 = vmatprep.subr.mxu0 0.0
    %1162 = vmatpush2.msra.mxu0 0.0
    %1163 = vmatprep.subr.mxu0 0.0
    %1164 = vmatpush2.msra.mxu0 0.0
    %1165 = vmatprep.subr.mxu0 0.0
    %1166 = vmatpush2.msra.mxu0 0.0
    %1167 = vmatprep.subr.mxu0 0.0
    %1168 = vmatpush2.msra.mxu0 0.0
    %1169 = vmatprep.subr.mxu0 0.0
    %1170 = vmatpush2.msra.mxu0 0.0
    %1171 = vmatprep.subr.mxu0 0.0
    %1172 = vmatpush2.msra.mxu0 0.0
    %1173 = vmatprep.subr.mxu0 0.0
    %1174 = vmatpush2.msra.mxu0 0.0
    %1175 = vmatprep.subr.mxu0 0.0
    %1176 = vmatpush2.msra.mxu0 0.0
    %1177 = vmatprep.subr.mxu0 0.0
    %1178 = vmatpush2.msra.mxu0 0.0
    %1179 = vmatprep.subr.mxu0 0.0
    %1180 = vmatpush2.msra.mxu0 0.0
    %1181 = vmatprep.subr.mxu0 0.0
    %1182 = vmatpush2.msra.mxu0 0.0
    %1183 = vmatprep.subr.mxu0 0.0
    %1184 = vmatpush2.msra.mxu0 0.0
    %1185 = vmatprep.subr.mxu0 0.0
    %1186 = vmatpush2.msra.mxu0 0.0
    %1187 = vmatprep.mubr.f32.mxu0 0.0
    %1188 = vmatmul.mubr.f32.gmra.mxu0 %v1023
    %v1189 = vpop.f32.mrf.mxu0
    %v1190 = vadd.f32 %v1004, %v1189
    %v1191 = vpop.f32.mrf.mxu0
    %v1192 = vadd.f32 %v1004, %v1191
    %1193 = vmatprep.mubr.f32.mxu0 0.0
    %1194 = vmatmul.mubr.f32.gmra.mxu0 %v1026
    %v1195 = vpop.f32.mrf.mxu0
    %v1196 = vadd.f32 %v1009, %v1195
    %v1197 = vpop.f32.mrf.mxu0
    %v1198 = vadd.f32 %v1009, %v1197
    %1199 = vmatprep.mubr.f32.mxu0 0.0
    %1200 = vmatmul.mubr.f32.gmra.mxu0 %v1029
    %v1201 = vpop.f32.mrf.mxu0
    %v1202 = vadd.f32 %v1014, %v1201
    %v1203 = vpop.f32.mrf.mxu0
    %v1204 = vadd.f32 %v1014, %v1203
    %1205 = vmatprep.mubr.f32.mxu0 0.0
    %1206 = vmatmul.mubr.f32.gmra.mxu0 %v1032
    %v1207 = vpop.f32.mrf.mxu0
    %v1208 = vadd.f32 %v1019, %v1207
    %v1209 = vpop.f32.mrf.mxu0
    %v1210 = vadd.f32 %v1019, %v1209
    %1211 = vdwg.mxu0
    %v1212 = vmax.f32 %v1101, 0.0
    %v1213 = vmax.f32 %v1103, 0.0
    %v1214 = vmax.f32 %v1190, 0.0
    %v1215 = vmax.f32 %v1192, 0.0
    %v1216 = vmax.f32 %v1107, 0.0
    %v1217 = vmax.f32 %v1109, 0.0
    %v1218 = vmax.f32 %v1196, 0.0
    %v1219 = vmax.f32 %v1198, 0.0
    %v1220 = vmax.f32 %v1113, 0.0
    %v1221 = vmax.f32 %v1115, 0.0
    %v1222 = vmax.f32 %v1202, 0.0
    %v1223 = vmax.f32 %v1204, 0.0
    %v1224 = vmax.f32 %v1119, 0.0
    %v1225 = vmax.f32 %v1121, 0.0
    %v1226 = vmax.f32 %v1208, 0.0
    %v1227 = vmax.f32 %v1210, 0.0
    %v1228 = vld [vmem:[%s7] sm:$0xff]
    %v1229 = vld [vmem:[%s7 + $0x8] sm:$0xff]
    %v1230 = vld [vmem:[%s7 + $0x10] sm:$0xff]
    %v1231 = vld [vmem:[%s7 + $0x18] sm:$0xff]
    %v1232 = vld [vmem:[#allocation2] sm:$0x1]
    %1234 = vset.pattern.permute.xlu0 0
    %1235 = vperm.xlu0 %1234, %v1228
    %v1236 = vpop.permute.xlu0 %1235
    %1239 = vset.pattern.permute.xlu0 0
    %1240 = vperm.xlu0 %1239, %v1229
    %v1241 = vpop.permute.xlu0 %1240
    %1244 = vset.pattern.permute.xlu0 0
    %1245 = vperm.xlu0 %1244, %v1230
    %v1246 = vpop.permute.xlu0 %1245
    %1249 = vset.pattern.permute.xlu0 0
    %1250 = vperm.xlu0 %1249, %v1231
    %v1251 = vpop.permute.xlu0 %1250
    %v1253 = vmul.f32 %v1236, %v1212
    %v1254 = vmul.f32 %v1236, %v1213
    %v1255 = vmul.f32 %v1236, %v1214
    %v1256 = vmul.f32 %v1236, %v1215
    %v1257 = vmul.f32 %v1241, %v1216
    %v1258 = vmul.f32 %v1241, %v1217
    %v1259 = vmul.f32 %v1241, %v1218
    %v1260 = vmul.f32 %v1241, %v1219
    %v1261 = vmul.f32 %v1246, %v1220
    %v1262 = vmul.f32 %v1246, %v1221
    %v1263 = vmul.f32 %v1246, %v1222
    %v1264 = vmul.f32 %v1246, %v1223
    %v1265 = vmul.f32 %v1251, %v1224
    %v1266 = vmul.f32 %v1251, %v1225
    %v1267 = vmul.f32 %v1251, %v1226
    %v1268 = vmul.f32 %v1251, %v1227
    %v1269 = vadd.f32 %v1253, %v1257
    %v1270 = vadd.f32 %v1269, %v1261
    %v1271 = vadd.f32 %v1270, %v1265
    %v1272 = vrot.slane %v1271, 4
    %v1273 = vadd.f32 %v1271, %v1272
    %v1274 = vrot.slane %v1273, 2
    %v1275 = vadd.f32 %v1273, %v1274
    %v1276 = vrot.slane %v1275, 1
    %v1277 = vadd.f32 %v1275, %v1276
    %v1278 = vadd.f32 %v1254, %v1258
    %v1279 = vadd.f32 %v1278, %v1262
    %v1280 = vadd.f32 %v1279, %v1266
    %v1281 = vrot.slane %v1280, 4
    %v1282 = vadd.f32 %v1280, %v1281
    %v1283 = vrot.slane %v1282, 2
    %v1284 = vadd.f32 %v1282, %v1283
    %v1285 = vrot.slane %v1284, 1
    %v1286 = vadd.f32 %v1284, %v1285
    %v1287 = vadd.f32 %v1255, %v1259
    %v1288 = vadd.f32 %v1287, %v1263
    %v1289 = vadd.f32 %v1288, %v1267
    %v1290 = vrot.slane %v1289, 4
    %v1291 = vadd.f32 %v1289, %v1290
    %v1292 = vrot.slane %v1291, 2
    %v1293 = vadd.f32 %v1291, %v1292
    %v1294 = vrot.slane %v1293, 1
    %v1295 = vadd.f32 %v1293, %v1294
    %v1296 = vadd.f32 %v1256, %v1260
    %v1297 = vadd.f32 %v1296, %v1264
    %v1298 = vadd.f32 %v1297, %v1268
    %v1299 = vrot.slane %v1298, 4
    %v1300 = vadd.f32 %v1298, %v1299
    %v1301 = vrot.slane %v1300, 2
    %v1302 = vadd.f32 %v1300, %v1301
    %v1303 = vrot.slane %v1302, 1
    %v1304 = vadd.f32 %v1302, %v1303
    %1306 = vset.pattern.permute.xlu0 0
    %1307 = vperm.xlu0 %1306, %v1232
    %v1308 = vpop.permute.xlu0 %1307
    %v1310 = vlaneseq
    %v1311 = vshrl.u32 %v1310, 7
    %v1312 = vsub.s32 0, %v1311
    %v1313 = vrot.slane %v1308, %v1312
    %v1314 = vadd.f32 %v1277, %v1313
    %v1315 = vadd.f32 %v1286, %v1313
    %v1316 = vadd.f32 %v1295, %v1313
    %v1317 = vadd.f32 %v1304, %v1313
    %v1322 = vcombine.low %v1314, %v1315
    %v1323 = vcombine.low %v1316, %v1317
    %v1325 = vunpack.c.l.s4 1966171168
    %v1326 = vunpack.c.0.s8 %v1325
    %v1327 = vlaneseq
    %v1328 = vshrl.u32 %v1327, 7
    %v1329 = vsub.s32 %v1326, %v1328
    %v1330 = vrot.slane %v1322, %v1329
    %v1332 = vunpack.c.l.s4 1966171168
    %v1333 = vunpack.c.0.s8 %v1332
    %v1334 = vlaneseq
    %v1335 = vshrl.u32 %v1334, 7
    %v1336 = vsub.s32 %v1333, %v1335
    %v1337 = vrot.slane %v1323, %v1336
    %v1338 = vcombine.low %v1330, %v1337
    %v1340 = vunpack.c.l.s4 1966171168
    %v1341 = vunpack.c.0.s8 %v1340
    %v1342 = vlaneseq
    %v1343 = vshrl.u32 %v1342, 7
    %v1344 = vsub.s32 %v1341, %v1343
    %v1345 = vrot.slane %v1338, %v1344
    %v1347 = vlaneseq
    %vm1348 = vcmp.ge.s32.totalorder %v1347, 0
    %vm1349 = vcmp.lt.s32.totalorder %v1347, 512
    %vm1350 = vmand %vm1348, %vm1349
    %1351 = vst.msk [vmem:[#allocation3] sm:$0xf] %vm1350, %v1345
    // Predicated region
    $region38: #{tpu_custom_call.1} parent=1 // pred_check
      _
    $region39: #{tpu_custom_call.1} parent=1 // pred_check_branch
      %1353 = sbr.rel (0) target = $region41
    $region40: #{tpu_custom_call.1} parent=1 // pred_region
      %s1355 = ssub.s32 64, 64
      %1356 = vsyncadd [#allocation4], %s1355
      %s1358 = sshll.u32 [#allocation3], 4
      %s1359 = int_to_ptr.vmem [resolvable:$true] %s1358
      %1361 = dma.vmem_to_hbm [thread:$0]  %s1359, 64, %s9, [#allocation4]
    $region41: #{tpu_custom_call.1} parent=1 // pred_fallthru
      _
    // Predicated region
    $region42: #{tpu_custom_call.1} parent=1 // pred_check
      _
    $region43: #{tpu_custom_call.1} parent=1 // pred_check_branch
      %1363 = sbr.rel (0) target = $region45
    $region44: #{tpu_custom_call.1} parent=1 // pred_region
      %1364 = dma.done [#allocation4], 64
    $region45: #{tpu_custom_call.1} parent=1 // pred_fallthru
      _
    %1365 = vsyncpa [#allocation4], 1

</llo_original>
